<compile_context>
chip_gen: v6e
topology: v6e:2x2x1
jax: 0.10.0
libtpu: 0.0.40
codegen_flags: <defaults>
</compile_context>

<pallas_src>
import functools

import jax
import jax.numpy as jnp
from jax import lax
from jax.experimental import pallas as pl
from jax.experimental.pallas import tpu as pltpu


def _round_up(x, m):
    return ((x + m - 1) // m) * m


def _cdiv(a, b):
    return -(-a // b)


# ---------------------------------------------------------------------------
# Kernel: fused 2-layer MLP (weight-norm scale pre-folded into W1/W2).
#   h = relu(q @ W1^T + b1)
#   o = h @ W2^T + b2
# ---------------------------------------------------------------------------
def classifier_kernel(q_ref, w1_ref, b1_ref, w2_ref, b2_ref, o_ref):
    # Layer 1: cast q f32 -> bf16 in-kernel, contract over K = in_features with
    # transposed-RHS layout [mid_p, in_f] so no weight transpose is needed.
    q = q_ref[...].astype(w1_ref.dtype)
    h = lax.dot_general(
        q, w1_ref[...],
        dimension_numbers=(((1,), (1,)), ((), ())),
        preferred_element_type=jnp.float32,
    )
    h = jnp.maximum(h + b1_ref[...], 0.0)          # bias + ReLU in f32

    # Layer 2: bf16 x bf16 -> f32 accumulation, narrow (out_f) result.
    o = lax.dot_general(
        h.astype(w2_ref.dtype), w2_ref[...],
        dimension_numbers=(((1,), (1,)), ((), ())),
        preferred_element_type=jnp.float32,
    )
    o_ref[...] = (o + b2_ref[...]).astype(o_ref.dtype)


# ---------------------------------------------------------------------------
# One-time parameter prep: fold weight-norm scale, pad hidden dim to 128 lanes,
# cast weights to bf16. Returned pytree contains ONLY arrays (jit-safe).
# ---------------------------------------------------------------------------
def prepare_params(raw, compute_dtype=jnp.bfloat16):
    v1, g1, b1 = raw["v1"], raw["g1"], raw["b1"]      # v1: [mid, in]
    v2, g2, b2 = raw["v2"], raw["g2"], raw["b2"]      # v2: [out, mid]
    mid_f, _in_f = v1.shape
    mid_p = _round_up(mid_f, 128)                     # lane-dense hidden activation

    v1f = v1.astype(jnp.float32)
    v2f = v2.astype(jnp.float32)
    s1 = g1 / jnp.sqrt(jnp.sum(v1f * v1f))            # scalar Frobenius weight-norm
    s2 = g2 / jnp.sqrt(jnp.sum(v2f * v2f))

    w1 = jnp.pad(s1 * v1f, ((0, mid_p - mid_f), (0, 0))).astype(compute_dtype)  # [mid_p, in_f]
    w2 = jnp.pad(s2 * v2f, ((0, 0), (0, mid_p - mid_f))).astype(compute_dtype)  # [out_f, mid_p]
    b1p = jnp.pad(b1.reshape(1, -1).astype(jnp.float32), ((0, 0), (0, mid_p - mid_f)))
    b2p = b2.reshape(1, -1).astype(jnp.float32)
    return {"w1": w1, "b1": b1p, "w2": w2, "b2": b2p}


# ---------------------------------------------------------------------------
# Per-call forward path.
# ---------------------------------------------------------------------------
@functools.partial(jax.jit, static_argnames=("block_batch",))
def classifier_forward(q, params, *, block_batch=2048):
    """q: [B, in_features] float32 -> [B, out_features] float32."""
    B, in_f = q.shape
    w1, b1, w2, b2 = params["w1"], params["b1"], params["w2"], params["b2"]
    mid_p, in_f_w = w1.shape
    out_f = w2.shape[0]
    assert in_f == in_f_w, "q feature dim does not match W1"

    # Batch tile: multiple of 8 sublanes; at least 2 grid steps when B allows
    # (so v7x's 2 TensorCores both get work); padding waste < 8 rows per step.
    max_tb = max(8, min(block_batch, _round_up(_cdiv(B, 2), 8)))
    steps = _cdiv(B, max_tb)
    tb = _round_up(_cdiv(B, steps), 8)
    b_pad = steps * tb

    q_p = q if b_pad == B else jnp.pad(q, ((0, b_pad - B), (0, 0)))

    cost = pl.CostEstimate(
        flops=2 * b_pad * (in_f * mid_p + mid_p * out_f),
        transcendentals=0,
        bytes_accessed=(b_pad * (in_f + out_f) * 4
                        + w1.size * 2 + w2.size * 2
                        + b1.size * 4 + b2.size * 4),
    )

    out = pl.pallas_call(
        classifier_kernel,
        out_shape=jax.ShapeDtypeStruct((b_pad, out_f), jnp.float32),
        grid=(steps,),
        in_specs=[
            pl.BlockSpec((tb, in_f), lambda i: (i, 0)),        # q tile (f32, K = in_f)
            pl.BlockSpec((mid_p, in_f), lambda i: (0, 0)),     # W1 (pinned)
            pl.BlockSpec((1, mid_p), lambda i: (0, 0)),        # b1 (pinned)
            pl.BlockSpec((out_f, mid_p), lambda i: (0, 0)),    # W2 (pinned)
            pl.BlockSpec((1, out_f), lambda i: (0, 0)),        # b2 (pinned)
        ],
        out_specs=pl.BlockSpec((tb, out_f), lambda i: (i, 0)), # narrow output
        compiler_params=pltpu.CompilerParams(
            dimension_semantics=("parallel",),
        ),
        cost_estimate=cost,
    )(q_p, w1, b1, w2, b2)

    return out if b_pad == B else out[:B]


# ---------------------------------------------------------------------------
# References.
# ---------------------------------------------------------------------------
def reference_forward_f32(q, raw):
    """Exact PyTorch-semantics reference in f32."""
    v1, v2 = raw["v1"], raw["v2"]
    w1 = raw["g1"] * v1 / jnp.sqrt(jnp.sum(v1 * v1))
    w2 = raw["g2"] * v2 / jnp.sqrt(jnp.sum(v2 * v2))
    h = jnp.maximum(q @ w1.T + raw["b1"], 0.0)
    return h @ w2.T + raw["b2"]


def reference_forward_emulated(q, params):
    """Same bf16-weight / f32-accumulate math as the kernel, in plain JAX."""
    qb = q.astype(params["w1"].dtype)
    h = lax.dot_general(qb, params["w1"], (((1,), (1,)), ((), ())),
                        preferred_element_type=jnp.float32)
    h = jnp.maximum(h + params["b1"], 0.0)
    o = lax.dot_general(h.astype(params["w2"].dtype), params["w2"],
                        (((1,), (1,)), ((), ())),
                        preferred_element_type=jnp.float32)
    return o + params["b2"]


if __name__ == "__main__":
    # Small but grid-exercising shapes (>= 2 grid steps on the batch axis).
    B, IN_F, MID_F, OUT_F = 256, 32, 64, 16

    key = jax.random.PRNGKey(0)
    k_q, k_v1, k_b1, k_v2, k_b2 = jax.random.split(key, 5)

    q = jax.random.normal(k_q, (B, IN_F), dtype=jnp.float32)

    # Deterministic synthetic parameters (Linear-style init scale).
    v1 = jax.random.normal(k_v1, (MID_F, IN_F), dtype=jnp.float32) * (1.0 / IN_F ** 0.5)
    b1 = jax.random.normal(k_b1, (MID_F,), dtype=jnp.float32) * 0.01
    v2 = jax.random.normal(k_v2, (OUT_F, MID_F), dtype=jnp.float32) * (1.0 / MID_F ** 0.5)
    b2 = jax.random.normal(k_b2, (OUT_F,), dtype=jnp.float32) * 0.01
    # weight_norm init sets g = ||V||_F; perturb slightly to exercise the scaling.
    g1 = jnp.sqrt(jnp.sum(v1 * v1)) * 1.1
    g2 = jnp.sqrt(jnp.sum(v2 * v2)) * 0.9

    raw_params = {"v1": v1, "g1": g1, "b1": b1, "v2": v2, "g2": g2, "b2": b2}
    params = prepare_params(raw_params)     # one-time: fold scale + pad mid + bf16

    out = classifier_forward(q, params)
    out = jax.block_until_ready(out)
    assert out.shape == (B, OUT_F)

    # (1) tight check against a JAX emulation of the exact kernel math (bf16 weights,
    #     f32 accumulation) -> validates the Pallas lowering.
    ref_emu = reference_forward_emulated(q, params)
    assert jnp.allclose(out, ref_emu, atol=2e-3, rtol=2e-3), "mismatch vs emulated ref"

    # (2) loose check against the full-f32 PyTorch-semantics reference -> validates the
    #     bf16 compute path stays within expected precision.
    ref_f32 = reference_forward_f32(q, raw_params)
    assert jnp.allclose(out, ref_f32, atol=5e-2, rtol=5e-2), "mismatch vs f32 reference"

    print("KERNEL_OK")
</pallas_src>

<mosaic_0001>
module attributes {stable_mosaic.version = 11 : i64} {
  func.func @classifier_kernel(%arg0: i32, %arg1: memref<128x32xf32, #tpu.memory_space<vmem>>, %arg2: memref<128x32xbf16, #tpu.memory_space<vmem>>, %arg3: memref<1x128xf32, #tpu.memory_space<vmem>>, %arg4: memref<16x128xbf16, #tpu.memory_space<vmem>>, %arg5: memref<1x16xf32, #tpu.memory_space<vmem>>, %arg6: memref<128x16xf32, #tpu.memory_space<vmem>>) attributes {dimension_semantics = [#tpu.dimension_semantics<parallel>], iteration_bounds = array<i64: 2>, scalar_prefetch = 0 : i64, scratch_operands = 0 : i64, tpu.core_type = #tpu.core_type<tc>, window_params = [{transform_indices = @transform_0, window_bounds = array<i64: 128, 32>}, {pipeline_mode = #tpu.pipeline_mode<synchronous>, transform_indices = @transform_1, window_bounds = array<i64: 128, 32>}, {pipeline_mode = #tpu.pipeline_mode<synchronous>, transform_indices = @transform_2, window_bounds = array<i64: 1, 128>}, {pipeline_mode = #tpu.pipeline_mode<synchronous>, transform_indices = @transform_3, window_bounds = array<i64: 16, 128>}, {pipeline_mode = #tpu.pipeline_mode<synchronous>, transform_indices = @transform_4, window_bounds = array<i64: 1, 16>}, {transform_indices = @transform_5, window_bounds = array<i64: 128, 16>}]} {
    %c0 = arith.constant 0 : index
    %c0_0 = arith.constant 0 : index
    %0 = vector.load %arg1[%c0, %c0_0] : memref<128x32xf32, #tpu.memory_space<vmem>>, vector<128x32xf32>
    %1 = arith.truncf %0 : vector<128x32xf32> to vector<128x32xbf16>
    %c0_1 = arith.constant 0 : index
    %c0_2 = arith.constant 0 : index
    %2 = vector.load %arg2[%c0_1, %c0_2] : memref<128x32xbf16, #tpu.memory_space<vmem>>, vector<128x32xbf16>
    %cst = arith.constant dense<0.000000e+00> : vector<128x128xf32>
    %3 = tpu.matmul %1, %2, %cst {dimension_numbers = #tpu.dot_dimension_numbers<[1], [1], [0], [0], [0, 0, 1, 0], [], []>} : vector<128x32xbf16>, vector<128x32xbf16>, vector<128x128xf32> -> vector<128x128xf32>
    %c0_3 = arith.constant 0 : index
    %c0_4 = arith.constant 0 : index
    %4 = vector.load %arg3[%c0_3, %c0_4] : memref<1x128xf32, #tpu.memory_space<vmem>>, vector<1x128xf32>
    %5 = vector.broadcast %4 : vector<1x128xf32> to vector<128x128xf32>
    %6 = arith.addf %3, %5 : vector<128x128xf32>
    %cst_5 = arith.constant 0.000000e+00 : f32
    %7 = vector.broadcast %cst_5 : f32 to vector<128x128xf32>
    %8 = arith.maximumf %6, %7 : vector<128x128xf32>
    %9 = arith.truncf %8 : vector<128x128xf32> to vector<128x128xbf16>
    %c0_6 = arith.constant 0 : index
    %c0_7 = arith.constant 0 : index
    %10 = vector.load %arg4[%c0_6, %c0_7] : memref<16x128xbf16, #tpu.memory_space<vmem>>, vector<16x128xbf16>
    %cst_8 = arith.constant dense<0.000000e+00> : vector<128x16xf32>
    %11 = tpu.matmul %9, %10, %cst_8 {dimension_numbers = #tpu.dot_dimension_numbers<[1], [1], [0], [0], [0, 0, 1, 0], [], []>} : vector<128x128xbf16>, vector<16x128xbf16>, vector<128x16xf32> -> vector<128x16xf32>
    %c0_9 = arith.constant 0 : index
    %c0_10 = arith.constant 0 : index
    %12 = vector.load %arg5[%c0_9, %c0_10] : memref<1x16xf32, #tpu.memory_space<vmem>>, vector<1x16xf32>
    %13 = vector.broadcast %12 : vector<1x16xf32> to vector<128x16xf32>
    %14 = arith.addf %11, %13 : vector<128x16xf32>
    %c0_11 = arith.constant 0 : index
    %c0_12 = arith.constant 0 : index
    %15 = vector.load %arg6[%c0_11, %c0_12] : memref<128x16xf32, #tpu.memory_space<vmem>>, vector<128x16xf32>
    tpu.vector_store %arg6[%c0_11, %c0_12], %14 {strides = array<i32>} : memref<128x16xf32, #tpu.memory_space<vmem>>, vector<128x16xf32>,
    return
  }
  func.func @transform_0(%arg0: i32) -> (i32, i32) {
    %c0_i32 = arith.constant 0 : i32
    %c0_i32_0 = arith.constant 0 : i32
    return %arg0, %c0_i32 : i32, i32
  }
  func.func @transform_1(%arg0: i32) -> (i32, i32) {
    %c0_i32 = arith.constant 0 : i32
    %c0_i32_0 = arith.constant 0 : i32
    %c0_i32_1 = arith.constant 0 : i32
    return %c0_i32, %c0_i32_0 : i32, i32
  }
  func.func @transform_2(%arg0: i32) -> (i32, i32) {
    %c0_i32 = arith.constant 0 : i32
    %c0_i32_0 = arith.constant 0 : i32
    %c0_i32_1 = arith.constant 0 : i32
    return %c0_i32, %c0_i32_0 : i32, i32
  }
  func.func @transform_3(%arg0: i32) -> (i32, i32) {
    %c0_i32 = arith.constant 0 : i32
    %c0_i32_0 = arith.constant 0 : i32
    %c0_i32_1 = arith.constant 0 : i32
    return %c0_i32, %c0_i32_0 : i32, i32
  }
  func.func @transform_4(%arg0: i32) -> (i32, i32) {
    %c0_i32 = arith.constant 0 : i32
    %c0_i32_0 = arith.constant 0 : i32
    %c0_i32_1 = arith.constant 0 : i32
    return %c0_i32, %c0_i32_0 : i32, i32
  }
  func.func @transform_5(%arg0: i32) -> (i32, i32) {
    %c0_i32 = arith.constant 0 : i32
    %c0_i32_0 = arith.constant 0 : i32
    return %arg0, %c0_i32 : i32, i32
  }
}

</mosaic_0001>

<llo_original>
// kernel: classifier_forward.1
$region0: #{classifier_forward.1}
  #allocation0 [shape = 'u32[]', space=smem, size = 0x4, offset = 0x4, fixed_abs, tag = 'smem constant byte address 0x4 - core index']
  #allocation1 [shape = 'u32[144,128]{1,0:T(1,128)}', space=vmem, size = 0x12000, scoped, tag = 'internal scratch']
  %s0 = inlined_call_operand.vmem [shape: f32[256,32], index: 0, kind: input, shape index: {}]
  %s1 = inlined_call_operand.vmem [shape: bf16[128,32], index: 1, kind: input, shape index: {}]
  %s2 = inlined_call_operand.vmem [shape: f32[1,128], index: 2, kind: input, shape index: {}]
  %s3 = inlined_call_operand.vmem [shape: bf16[16,128], index: 3, kind: input, shape index: {}]
  %s4 = inlined_call_operand.vmem [shape: f32[1,16], index: 4, kind: input, shape index: {}]
  %s5 = inlined_call_operand.vmem [shape: f32[256,16], index: 5, kind: output, shape index: {}]
  %s6 = sld [smem:[#allocation0]]
  $region53: #{classifier_forward.1} parent=0
    _
  %s8 = ssub.s32 1, %s6
  %s9 = scalar_select 0, %s8, %s6
  loop: start=0, step=1, limit=4
  $region2: #{classifier_forward.1} parent=0 // loop_pre_header
    _
  $region3: #{classifier_forward.1} parent=0 // loop_header
    %s11 = sphi 0, %s15
    %p12 = scmp.ge.s32.totalorder %s11, 4
    %s21 = sphi 0, %s23
    %s24 = sphi 0, %s21
    %s25 = sphi 0, %s24
    %s41 = sphi 0, %s25
    %s45 = sphi 0, %s45
    %s47 = sphi 0, %s45
    %s48 = sphi 0, %s47
    %s62 = sphi 0, %s48
    %s66 = sphi 0, %s66
    %s68 = sphi 0, %s66
    %s69 = sphi 0, %s68
    %s83 = sphi 0, %s69
    %s87 = sphi 0, %s87
    %s89 = sphi 0, %s87
    %s90 = sphi 0, %s89
    %s104 = sphi 0, %s90
    %s108 = sphi 0, %s108
    %s110 = sphi 0, %s108
    %s111 = sphi 0, %s110
    %s125 = sphi 0, %s111
    %s131 = sphi 0, %s133
    %s134 = sphi 0, %s131
    %s135 = sphi 0, %s134
    %s151 = sphi 0, %s135
  $region4: #{classifier_forward.1} parent=0 // loop_header_branch
    %14 = sbr.rel (%p12) target = $region8
  $region5: #{classifier_forward.1} parent=0 // loop_body
    %s16 = ssub.s32 %s11, 1
    %s17 = ssub.s32 %s11, 2
    %s18 = sadd.s32 %s11, 1
    %s19 = ssub.s32 %s11, %s18
    %p20 = scmp.eq.s32.totalorder %s19, 0
    %s22 = sadd.s32 %s21, 1
    %s23 = scalar_select %p20, %s21, %s22
    %p26 = pneg %p20
    %p27 = scmp.eq.s32.totalorder %s11, 1
    %p28 = por %p26, %p27
    %p29 = scmp.ne.s32.totalorder %s21, %s24
    %p30 = scmp.eq.s32.totalorder %s11, 0
    %p31 = por %p29, %p30
    %p32 = scmp.ne.s32.totalorder %s21, %s24
    %p33 = scmp.eq.s32.totalorder %s16, 1
    %p34 = por %p32, %p33
    %p35 = scmp.ne.s32.totalorder %s24, %s25
    %p36 = scmp.eq.s32.totalorder %s16, 0
    %p37 = por %p35, %p36
    %p38 = scmp.ne.s32.totalorder %s24, %s25
    %p39 = scmp.eq.s32.totalorder %s17, 1
    %p40 = por %p38, %p39
    %p42 = scmp.ne.s32.totalorder %s25, %s41
    %p43 = scmp.eq.s32.totalorder %s17, 0
    %p44 = por %p42, %p43
    %s46 = sadd.s32 %s45, 1
    %p49 = scmp.eq.s32.totalorder %s11, 1
    %p50 = scmp.ne.s32.totalorder %s45, %s47
    %p51 = scmp.eq.s32.totalorder %s11, 0
    %p52 = por %p50, %p51
    %p53 = scmp.ne.s32.totalorder %s45, %s47
    %p54 = scmp.eq.s32.totalorder %s16, 1
    %p55 = por %p53, %p54
    %p56 = scmp.ne.s32.totalorder %s47, %s48
    %p57 = scmp.eq.s32.totalorder %s16, 0
    %p58 = por %p56, %p57
    %p59 = scmp.ne.s32.totalorder %s47, %s48
    %p60 = scmp.eq.s32.totalorder %s17, 1
    %p61 = por %p59, %p60
    %p63 = scmp.ne.s32.totalorder %s48, %s62
    %p64 = scmp.eq.s32.totalorder %s17, 0
    %p65 = por %p63, %p64
    %s67 = sadd.s32 %s66, 1
    %p70 = scmp.eq.s32.totalorder %s11, 1
    %p71 = scmp.ne.s32.totalorder %s66, %s68
    %p72 = scmp.eq.s32.totalorder %s11, 0
    %p73 = por %p71, %p72
    %p74 = scmp.ne.s32.totalorder %s66, %s68
    %p75 = scmp.eq.s32.totalorder %s16, 1
    %p76 = por %p74, %p75
    %p77 = scmp.ne.s32.totalorder %s68, %s69
    %p78 = scmp.eq.s32.totalorder %s16, 0
    %p79 = por %p77, %p78
    %p80 = scmp.ne.s32.totalorder %s68, %s69
    %p81 = scmp.eq.s32.totalorder %s17, 1
    %p82 = por %p80, %p81
    %p84 = scmp.ne.s32.totalorder %s69, %s83
    %p85 = scmp.eq.s32.totalorder %s17, 0
    %p86 = por %p84, %p85
    %s88 = sadd.s32 %s87, 1
    %p91 = scmp.eq.s32.totalorder %s11, 1
    %p92 = scmp.ne.s32.totalorder %s87, %s89
    %p93 = scmp.eq.s32.totalorder %s11, 0
    %p94 = por %p92, %p93
    %p95 = scmp.ne.s32.totalorder %s87, %s89
    %p96 = scmp.eq.s32.totalorder %s16, 1
    %p97 = por %p95, %p96
    %p98 = scmp.ne.s32.totalorder %s89, %s90
    %p99 = scmp.eq.s32.totalorder %s16, 0
    %p100 = por %p98, %p99
    %p101 = scmp.ne.s32.totalorder %s89, %s90
    %p102 = scmp.eq.s32.totalorder %s17, 1
    %p103 = por %p101, %p102
    %p105 = scmp.ne.s32.totalorder %s90, %s104
    %p106 = scmp.eq.s32.totalorder %s17, 0
    %p107 = por %p105, %p106
    %s109 = sadd.s32 %s108, 1
    %p112 = scmp.eq.s32.totalorder %s11, 1
    %p113 = scmp.ne.s32.totalorder %s108, %s110
    %p114 = scmp.eq.s32.totalorder %s11, 0
    %p115 = por %p113, %p114
    %p116 = scmp.ne.s32.totalorder %s108, %s110
    %p117 = scmp.eq.s32.totalorder %s16, 1
    %p118 = por %p116, %p117
    %p119 = scmp.ne.s32.totalorder %s110, %s111
    %p120 = scmp.eq.s32.totalorder %s16, 0
    %p121 = por %p119, %p120
    %p122 = scmp.ne.s32.totalorder %s110, %s111
    %p123 = scmp.eq.s32.totalorder %s17, 1
    %p124 = por %p122, %p123
    %p126 = scmp.ne.s32.totalorder %s111, %s125
    %p127 = scmp.eq.s32.totalorder %s17, 0
    %p128 = por %p126, %p127
    %s129 = ssub.s32 %s11, %s18
    %p130 = scmp.eq.s32.totalorder %s129, 0
    %s132 = sadd.s32 %s131, 1
    %s133 = scalar_select %p130, %s131, %s132
    %p136 = pneg %p130
    %p137 = scmp.eq.s32.totalorder %s11, 1
    %p138 = por %p136, %p137
    %p139 = scmp.ne.s32.totalorder %s131, %s134
    %p140 = scmp.eq.s32.totalorder %s11, 0
    %p141 = por %p139, %p140
    %p142 = scmp.ne.s32.totalorder %s131, %s134
    %p143 = scmp.eq.s32.totalorder %s16, 1
    %p144 = por %p142, %p143
    %p145 = scmp.ne.s32.totalorder %s134, %s135
    %p146 = scmp.eq.s32.totalorder %s16, 0
    %p147 = por %p145, %p146
    %p148 = scmp.ne.s32.totalorder %s134, %s135
    %p149 = scmp.eq.s32.totalorder %s17, 1
    %p150 = por %p148, %p149
    %p152 = scmp.ne.s32.totalorder %s135, %s151
    %p153 = scmp.eq.s32.totalorder %s17, 0
    %p154 = por %p152, %p153
    %p155 = scmp.le.s32.totalorder 1, %s11
    %p156 = scmp.lt.s32.totalorder %s11, 3
    %p157 = pnand %p155, %p156
    %p158 = pneg %p157
    // Predicated region
    $region9: #{classifier_forward.1} parent=5 // pred_check
      _
    $region10: #{classifier_forward.1} parent=5 // pred_check_branch
      %160 = sbr.rel (%p157) target = $region12
    $region11: #{classifier_forward.1} parent=5 // pred_region
      %s161 = ssub.s32 %s11, 1
      // Predicated region
      $region13: #{classifier_forward.1} parent=11 // pred_check
        %p162 = pneg %p58
      $region14: #{classifier_forward.1} parent=11 // pred_check_branch
        %164 = sbr.rel (%p162) target = $region16
      $region15: #{classifier_forward.1} parent=11 // pred_region
        _
      $region16: #{classifier_forward.1} parent=11 // pred_fallthru
        _
      // Predicated region
      $region17: #{classifier_forward.1} parent=11 // pred_check
        %p165 = pneg %p79
      $region18: #{classifier_forward.1} parent=11 // pred_check_branch
        %167 = sbr.rel (%p165) target = $region20
      $region19: #{classifier_forward.1} parent=11 // pred_region
        _
      $region20: #{classifier_forward.1} parent=11 // pred_fallthru
        _
      // Predicated region
      $region21: #{classifier_forward.1} parent=11 // pred_check
        %p168 = pneg %p100
      $region22: #{classifier_forward.1} parent=11 // pred_check_branch
        %170 = sbr.rel (%p168) target = $region24
      $region23: #{classifier_forward.1} parent=11 // pred_region
        _
      $region24: #{classifier_forward.1} parent=11 // pred_fallthru
        _
      // Predicated region
      $region25: #{classifier_forward.1} parent=11 // pred_check
        %p171 = pneg %p121
      $region26: #{classifier_forward.1} parent=11 // pred_check_branch
        %173 = sbr.rel (%p171) target = $region28
      $region27: #{classifier_forward.1} parent=11 // pred_region
        _
      $region28: #{classifier_forward.1} parent=11 // pred_fallthru
        _
    $region12: #{classifier_forward.1} parent=5 // pred_fallthru
      _
    %p174 = scmp.lt.s32.totalorder %s11, 2
    // Predicated region
    $region29: #{classifier_forward.1} parent=5 // pred_check
      %p175 = pneg %p174
    $region30: #{classifier_forward.1} parent=5 // pred_check_branch
      %177 = sbr.rel (%p175) target = $region32
    $region31: #{classifier_forward.1} parent=5 // pred_region
      // Predicated region
      $region33: #{classifier_forward.1} parent=31 // pred_check
        %p178 = pneg %p31
      $region34: #{classifier_forward.1} parent=31 // pred_check_branch
        %180 = sbr.rel (%p178) target = $region36
      $region35: #{classifier_forward.1} parent=31 // pred_region
        %s181 = smul.u32 16, %s11
        %p182 = scmp.lt.s32.totalorder %s181, 31
        %s183 = scalar_select %p182, %s181, 31
        %s184 = smul.addr %s183, 8
        %s185 = scalar_lea.vmem %s0, %s184
        %s186 = smul.u32 16, %s11
      $region36: #{classifier_forward.1} parent=31 // pred_fallthru
        _
    $region32: #{classifier_forward.1} parent=5 // pred_fallthru
      _
    %p187 = scmp.le.s32.totalorder 1, %s11
    %p188 = scmp.lt.s32.totalorder %s11, 3
    %p189 = pnand %p187, %p188
    %p190 = pneg %p189
    // Predicated region
    $region37: #{classifier_forward.1} parent=5 // pred_check
      _
    $region38: #{classifier_forward.1} parent=5 // pred_check_branch
      %192 = sbr.rel (%p189) target = $region40
    $region39: #{classifier_forward.1} parent=5 // pred_region
      %s193 = ssub.s32 %s11, 1
      %s194 = smul.u32 16, %s16
      %p195 = scmp.lt.s32.totalorder %s194, 31
      %s196 = scalar_select %p195, %s194, 31
      %s197 = smul.addr %s196, 8
      %s198 = scalar_lea.vmem %s0, %s197
      %p199 = pneg %p37
      %p200 = pneg %p34
      %p201 = pneg %p58
      %p202 = pneg %p55
      %p203 = pneg %p79
      %p204 = pneg %p76
      %p205 = pneg %p100
      %p206 = pneg %p97
      %p207 = pneg %p121
      %p208 = pneg %p118
      %p209 = pneg %p147
      %p210 = pneg %p144
      %s211 = smul.u32 16, %s16
      %p212 = scmp.lt.s32.totalorder %s211, 31
      %s213 = scalar_select %p212, %s211, 31
      %s214 = smul.addr %s213, 8
      %s215 = scalar_lea.vmem %s5, %s214
      %s216 = smul.u32 16, %s16
      %p217 = scmp.lt.s32.totalorder %s216, 31
      %s218 = scalar_select %p217, %s216, 31
      %s219 = smul.addr %s218, 8
      %s220 = scalar_lea.vmem %s0, %s219
      %s221 = smul.u32 16, %s16
      %s222 = smul.u32 16, %s16
      %p223 = scmp.lt.s32.totalorder %s222, 31
      %s224 = scalar_select %p223, %s222, 31
      %s225 = smul.addr %s224, 8
      %s226 = scalar_lea.vmem %s5, %s225
      %s227 = smul.u32 16, %s16
      %v229 = vld [vmem:[%s220] sm:$0xff]
      %v230 = vld [vmem:[%s220 + $0x8] sm:$0xff]
      %v231 = vld [vmem:[%s220 + $0x10] sm:$0xff]
      %v232 = vld [vmem:[%s220 + $0x18] sm:$0xff]
      %v233 = vld [vmem:[%s220 + $0x20] sm:$0xff]
      %v234 = vld [vmem:[%s220 + $0x28] sm:$0xff]
      %v235 = vld [vmem:[%s220 + $0x30] sm:$0xff]
      %v236 = vld [vmem:[%s220 + $0x38] sm:$0xff]
      %v237 = vld [vmem:[%s220 + $0x40] sm:$0xff]
      %v238 = vld [vmem:[%s220 + $0x48] sm:$0xff]
      %v239 = vld [vmem:[%s220 + $0x50] sm:$0xff]
      %v240 = vld [vmem:[%s220 + $0x58] sm:$0xff]
      %v241 = vld [vmem:[%s220 + $0x60] sm:$0xff]
      %v242 = vld [vmem:[%s220 + $0x68] sm:$0xff]
      %v243 = vld [vmem:[%s220 + $0x70] sm:$0xff]
      %v244 = vld [vmem:[%s220 + $0x78] sm:$0xff]
      %v245 = vpack.c.bf16 %v230, %v229
      %v246 = vpack.c.bf16 %v232, %v231
      %v247 = vpack.c.bf16 %v234, %v233
      %v248 = vpack.c.bf16 %v236, %v235
      %v249 = vpack.c.bf16 %v238, %v237
      %v250 = vpack.c.bf16 %v240, %v239
      %v251 = vpack.c.bf16 %v242, %v241
      %v252 = vpack.c.bf16 %v244, %v243
      %v253 = vld [vmem:[%s1] sm:$0xf]
      %v254 = vld [vmem:[%s1 + $0x4] sm:$0xf]
      %v255 = vld [vmem:[%s1 + $0x8] sm:$0xf]
      %v256 = vld [vmem:[%s1 + $0xc] sm:$0xf]
      %v257 = vld [vmem:[%s1 + $0x10] sm:$0xf]
      %v258 = vld [vmem:[%s1 + $0x14] sm:$0xf]
      %v259 = vld [vmem:[%s1 + $0x18] sm:$0xf]
      %v260 = vld [vmem:[%s1 + $0x1c] sm:$0xf]
      %v261 = vld [vmem:[%s1 + $0x20] sm:$0xf]
      %v262 = vld [vmem:[%s1 + $0x24] sm:$0xf]
      %v263 = vld [vmem:[%s1 + $0x28] sm:$0xf]
      %v264 = vld [vmem:[%s1 + $0x2c] sm:$0xf]
      %v265 = vld [vmem:[%s1 + $0x30] sm:$0xf]
      %v266 = vld [vmem:[%s1 + $0x34] sm:$0xf]
      %v267 = vld [vmem:[%s1 + $0x38] sm:$0xf]
      %v268 = vld [vmem:[%s1 + $0x3c] sm:$0xf]
      %v269 = vld [vmem:[%s2] sm:$0x1]
      %v271 = vlaneseq
      %v272 = vshrl.u32 %v271, 7
      %v273 = vsub.s32 0, %v272
      %v274 = vrot.slane %v269, %v273
      %v292 = vunpack.c.l.b16 %v253
      %v293 = vunpack.c.l.b16 %v254
      %v294 = vunpack.c.l.b16 %v255
      %v295 = vunpack.c.l.b16 %v256
      %v296 = vunpack.c.l.b16 %v257
      %v297 = vunpack.c.l.b16 %v258
      %v298 = vunpack.c.l.b16 %v259
      %v299 = vunpack.c.l.b16 %v260
      %v300 = vunpack.c.l.b16 %v261
      %v301 = vunpack.c.l.b16 %v262
      %v302 = vunpack.c.l.b16 %v263
      %v303 = vunpack.c.l.b16 %v264
      %v304 = vunpack.c.l.b16 %v265
      %v305 = vunpack.c.l.b16 %v266
      %v306 = vunpack.c.l.b16 %v267
      %v307 = vunpack.c.l.b16 %v268
      %v308 = vpack.c.b16 %v293, %v292
      %v309 = vpack.c.b16 %v295, %v294
      %v310 = vpack.c.b16 %v297, %v296
      %v311 = vpack.c.b16 %v299, %v298
      %v312 = vpack.c.b16 %v301, %v300
      %v313 = vpack.c.b16 %v303, %v302
      %v314 = vpack.c.b16 %v305, %v304
      %v315 = vpack.c.b16 %v307, %v306
      %vm316 = vcmask 261120
      %v318 = vsel %vm316, %v245, 0
      %v321 = vsel %vm316, %v246, 0
      %v324 = vsel %vm316, %v247, 0
      %v327 = vsel %vm316, %v248, 0
      %v330 = vsel %vm316, %v249, 0
      %v333 = vsel %vm316, %v250, 0
      %v336 = vsel %vm316, %v251, 0
      %v339 = vsel %vm316, %v252, 0
      %v342 = vsel %vm316, %v308, 0
      %v345 = vsel %vm316, %v309, 0
      %v348 = vsel %vm316, %v310, 0
      %v351 = vsel %vm316, %v311, 0
      %v354 = vsel %vm316, %v312, 0
      %v357 = vsel %vm316, %v313, 0
      %v360 = vsel %vm316, %v314, 0
      %v363 = vsel %vm316, %v315, 0
      %365 = vmatprep.subr.bf16.mxu0 0
      %366 = vmatpush1.bf16.xpose.msra.mxu0 %v363
      %367 = vmatprep.subr.bf16.mxu0 0
      %368 = vmatpush1.bf16.xpose.msra.mxu0 %v360
      %369 = vmatprep.subr.bf16.mxu0 0
      %370 = vmatpush1.bf16.xpose.msra.mxu0 %v357
      %371 = vmatprep.subr.bf16.mxu0 0
      %372 = vmatpush1.bf16.xpose.msra.mxu0 %v354
      %373 = vmatprep.subr.bf16.mxu0 0
      %374 = vmatpush1.bf16.xpose.msra.mxu0 %v351
      %375 = vmatprep.subr.bf16.mxu0 0
      %376 = vmatpush1.bf16.xpose.msra.mxu0 %v348
      %377 = vmatprep.subr.bf16.mxu0 0
      %378 = vmatpush1.bf16.xpose.msra.mxu0 %v345
      %379 = vmatprep.subr.bf16.mxu0 0
      %380 = vmatpush1.bf16.xpose.msra.mxu0 %v342
      %381 = vmatprep.subr.bf16.mxu0 0
      %382 = vmatpush2.bf16.xpose.msra.mxu0 0
      %383 = vmatprep.subr.bf16.mxu0 0
      %384 = vmatpush2.bf16.xpose.msra.mxu0 0
      %385 = vmatprep.subr.bf16.mxu0 0
      %386 = vmatpush2.bf16.xpose.msra.mxu0 0
      %387 = vmatprep.subr.bf16.mxu0 0
      %388 = vmatpush2.bf16.xpose.msra.mxu0 0
      %389 = vmatprep.subr.bf16.mxu0 0
      %390 = vmatpush2.bf16.xpose.msra.mxu0 0
      %391 = vmatprep.subr.bf16.mxu0 0
      %392 = vmatpush2.bf16.xpose.msra.mxu0 0
      %393 = vmatprep.subr.bf16.mxu0 0
      %394 = vmatpush2.bf16.xpose.msra.mxu0 0
      %395 = vmatprep.subr.bf16.mxu0 0
      %396 = vmatpush2.bf16.xpose.msra.mxu0 0
      %397 = vmatprep.mubr.bf16.mxu0 0
      %398 = vmatmul.mubr.bf16.gmra.mxu0 %v318
      %v399 = vpop.f32.mrf.mxu0
      %v400 = vadd.f32 %v274, %v399
      %v401 = vpop.f32.mrf.mxu0
      %v402 = vpop.f32.mrf.mxu0
      %v403 = vadd.f32 %v274, %v402
      %v404 = vpop.f32.mrf.mxu0
      %405 = vmatprep.mubr.bf16.mxu0 0
      %406 = vmatmul.mubr.bf16.gmra.mxu0 %v321
      %v407 = vpop.f32.mrf.mxu0
      %v408 = vadd.f32 %v274, %v407
      %v409 = vpop.f32.mrf.mxu0
      %v410 = vpop.f32.mrf.mxu0
      %v411 = vadd.f32 %v274, %v410
      %v412 = vpop.f32.mrf.mxu0
      %413 = vmatprep.mubr.bf16.mxu0 0
      %414 = vmatmul.mubr.bf16.gmra.mxu0 %v324
      %v415 = vpop.f32.mrf.mxu0
      %v416 = vadd.f32 %v274, %v415
      %v417 = vpop.f32.mrf.mxu0
      %v418 = vpop.f32.mrf.mxu0
      %v419 = vadd.f32 %v274, %v418
      %v420 = vpop.f32.mrf.mxu0
      %421 = vmatprep.mubr.bf16.mxu0 0
      %422 = vmatmul.mubr.bf16.gmra.mxu0 %v327
      %v423 = vpop.f32.mrf.mxu0
      %v424 = vadd.f32 %v274, %v423
      %v425 = vpop.f32.mrf.mxu0
      %v426 = vpop.f32.mrf.mxu0
      %v427 = vadd.f32 %v274, %v426
      %v428 = vpop.f32.mrf.mxu0
      %429 = vmatprep.mubr.bf16.mxu0 0
      %430 = vmatmul.mubr.bf16.gmra.mxu0 %v330
      %v431 = vpop.f32.mrf.mxu0
      %v432 = vadd.f32 %v274, %v431
      %v433 = vpop.f32.mrf.mxu0
      %v434 = vpop.f32.mrf.mxu0
      %v435 = vadd.f32 %v274, %v434
      %v436 = vpop.f32.mrf.mxu0
      %437 = vmatprep.mubr.bf16.mxu0 0
      %438 = vmatmul.mubr.bf16.gmra.mxu0 %v333
      %v439 = vpop.f32.mrf.mxu0
      %v440 = vadd.f32 %v274, %v439
      %v441 = vpop.f32.mrf.mxu0
      %v442 = vpop.f32.mrf.mxu0
      %v443 = vadd.f32 %v274, %v442
      %v444 = vpop.f32.mrf.mxu0
      %445 = vmatprep.mubr.bf16.mxu0 0
      %446 = vmatmul.mubr.bf16.gmra.mxu0 %v336
      %v447 = vpop.f32.mrf.mxu0
      %v448 = vadd.f32 %v274, %v447
      %v449 = vpop.f32.mrf.mxu0
      %v450 = vpop.f32.mrf.mxu0
      %v451 = vadd.f32 %v274, %v450
      %v452 = vpop.f32.mrf.mxu0
      %453 = vmatprep.mubr.bf16.mxu0 0
      %454 = vmatmul.mubr.bf16.gmra.mxu0 %v339
      %v455 = vpop.f32.mrf.mxu0
      %v456 = vadd.f32 %v274, %v455
      %v457 = vpop.f32.mrf.mxu0
      %v458 = vpop.f32.mrf.mxu0
      %v459 = vadd.f32 %v274, %v458
      %v460 = vpop.f32.mrf.mxu0
      %461 = vdwg.mxu0
      %v462 = vmax.f32 %v400, 0.0
      %v463 = vmax.f32 %v403, 0.0
      %v464 = vmax.f32 %v408, 0.0
      %v465 = vmax.f32 %v411, 0.0
      %v466 = vmax.f32 %v416, 0.0
      %v467 = vmax.f32 %v419, 0.0
      %v468 = vmax.f32 %v424, 0.0
      %v469 = vmax.f32 %v427, 0.0
      %v470 = vmax.f32 %v432, 0.0
      %v471 = vmax.f32 %v435, 0.0
      %v472 = vmax.f32 %v440, 0.0
      %v473 = vmax.f32 %v443, 0.0
      %v474 = vmax.f32 %v448, 0.0
      %v475 = vmax.f32 %v451, 0.0
      %v476 = vmax.f32 %v456, 0.0
      %v477 = vmax.f32 %v459, 0.0
      %v478 = vpack.c.bf16 %v463, %v462
      %v479 = vpack.c.bf16 %v465, %v464
      %v480 = vpack.c.bf16 %v467, %v466
      %v481 = vpack.c.bf16 %v469, %v468
      %v482 = vpack.c.bf16 %v471, %v470
      %v483 = vpack.c.bf16 %v473, %v472
      %v484 = vpack.c.bf16 %v475, %v474
      %v485 = vpack.c.bf16 %v477, %v476
      %v486 = vld [vmem:[%s3] sm:$0xf]
      %v487 = vld [vmem:[%s3 + $0x4] sm:$0xf]
      %v488 = vld [vmem:[%s4] sm:$0x1]
      %v490 = vlaneseq
      %v491 = vshrl.u32 %v490, 7
      %v492 = vsub.s32 0, %v491
      %v493 = vrot.slane %v488, %v492
      %v497 = vunpack.c.l.b16 %v486
      %v498 = vunpack.c.l.b16 %v487
      %v499 = vpack.c.b16 %v498, %v497
      %501 = vmatprep.subr.bf16.mxu0 0
      %502 = vmatpush1.bf16.xpose.msra.mxu0 0
      %503 = vmatprep.subr.bf16.mxu0 0
      %504 = vmatpush1.bf16.xpose.msra.mxu0 0
      %505 = vmatprep.subr.bf16.mxu0 0
      %506 = vmatpush1.bf16.xpose.msra.mxu0 0
      %507 = vmatprep.subr.bf16.mxu0 0
      %508 = vmatpush1.bf16.xpose.msra.mxu0 0
      %509 = vmatprep.subr.bf16.mxu0 0
      %510 = vmatpush1.bf16.xpose.msra.mxu0 0
      %511 = vmatprep.subr.bf16.mxu0 0
      %512 = vmatpush1.bf16.xpose.msra.mxu0 0
      %513 = vmatprep.subr.bf16.mxu0 0
      %514 = vmatpush1.bf16.xpose.msra.mxu0 0
      %515 = vmatprep.subr.bf16.mxu0 0
      %516 = vmatpush1.bf16.xpose.msra.mxu0 %v499
      %517 = vmatprep.subr.bf16.mxu0 0
      %518 = vmatpush2.bf16.xpose.msra.mxu0 0
      %519 = vmatprep.subr.bf16.mxu0 0
      %520 = vmatpush2.bf16.xpose.msra.mxu0 0
      %521 = vmatprep.subr.bf16.mxu0 0
      %522 = vmatpush2.bf16.xpose.msra.mxu0 0
      %523 = vmatprep.subr.bf16.mxu0 0
      %524 = vmatpush2.bf16.xpose.msra.mxu0 0
      %525 = vmatprep.subr.bf16.mxu0 0
      %526 = vmatpush2.bf16.xpose.msra.mxu0 0
      %527 = vmatprep.subr.bf16.mxu0 0
      %528 = vmatpush2.bf16.xpose.msra.mxu0 0
      %529 = vmatprep.subr.bf16.mxu0 0
      %530 = vmatpush2.bf16.xpose.msra.mxu0 0
      %531 = vmatprep.subr.bf16.mxu0 0
      %532 = vmatpush2.bf16.xpose.msra.mxu0 0
      %533 = vmatprep.mubr.bf16.mxu0 0
      %534 = vmatmul.mubr.bf16.gmra.mxu0 %v478
      %v535 = vpop.f32.mrf.mxu0
      %v536 = vadd.f32 %v493, %v535
      %v537 = vpop.f32.mrf.mxu0
      %v538 = vpop.f32.mrf.mxu0
      %v539 = vadd.f32 %v493, %v538
      %v540 = vpop.f32.mrf.mxu0
      %541 = vmatprep.mubr.bf16.mxu0 0
      %542 = vmatmul.mubr.bf16.gmra.mxu0 %v479
      %v543 = vpop.f32.mrf.mxu0
      %v544 = vadd.f32 %v493, %v543
      %v545 = vpop.f32.mrf.mxu0
      %v546 = vpop.f32.mrf.mxu0
      %v547 = vadd.f32 %v493, %v546
      %v548 = vpop.f32.mrf.mxu0
      %549 = vmatprep.mubr.bf16.mxu0 0
      %550 = vmatmul.mubr.bf16.gmra.mxu0 %v480
      %v551 = vpop.f32.mrf.mxu0
      %v552 = vadd.f32 %v493, %v551
      %v553 = vpop.f32.mrf.mxu0
      %v554 = vpop.f32.mrf.mxu0
      %v555 = vadd.f32 %v493, %v554
      %v556 = vpop.f32.mrf.mxu0
      %557 = vmatprep.mubr.bf16.mxu0 0
      %558 = vmatmul.mubr.bf16.gmra.mxu0 %v481
      %v559 = vpop.f32.mrf.mxu0
      %v560 = vadd.f32 %v493, %v559
      %v561 = vpop.f32.mrf.mxu0
      %v562 = vpop.f32.mrf.mxu0
      %v563 = vadd.f32 %v493, %v562
      %v564 = vpop.f32.mrf.mxu0
      %565 = vmatprep.mubr.bf16.mxu0 0
      %566 = vmatmul.mubr.bf16.gmra.mxu0 %v482
      %v567 = vpop.f32.mrf.mxu0
      %v568 = vadd.f32 %v493, %v567
      %v569 = vpop.f32.mrf.mxu0
      %v570 = vpop.f32.mrf.mxu0
      %v571 = vadd.f32 %v493, %v570
      %v572 = vpop.f32.mrf.mxu0
      %573 = vmatprep.mubr.bf16.mxu0 0
      %574 = vmatmul.mubr.bf16.gmra.mxu0 %v483
      %v575 = vpop.f32.mrf.mxu0
      %v576 = vadd.f32 %v493, %v575
      %v577 = vpop.f32.mrf.mxu0
      %v578 = vpop.f32.mrf.mxu0
      %v579 = vadd.f32 %v493, %v578
      %v580 = vpop.f32.mrf.mxu0
      %581 = vmatprep.mubr.bf16.mxu0 0
      %582 = vmatmul.mubr.bf16.gmra.mxu0 %v484
      %v583 = vpop.f32.mrf.mxu0
      %v584 = vadd.f32 %v493, %v583
      %v585 = vpop.f32.mrf.mxu0
      %v586 = vpop.f32.mrf.mxu0
      %v587 = vadd.f32 %v493, %v586
      %v588 = vpop.f32.mrf.mxu0
      %589 = vmatprep.mubr.bf16.mxu0 0
      %590 = vmatmul.mubr.bf16.gmra.mxu0 %v485
      %v591 = vpop.f32.mrf.mxu0
      %v592 = vadd.f32 %v493, %v591
      %v593 = vpop.f32.mrf.mxu0
      %v594 = vpop.f32.mrf.mxu0
      %v595 = vadd.f32 %v493, %v594
      %v596 = vpop.f32.mrf.mxu0
      %597 = vdwg.mxu0
      %vm598 = vcmask 130048
      %599 = vst.msk [vmem:[%s226] sm:$0xff] %vm598, %v536
      %600 = vst.msk [vmem:[%s226 + $0x8] sm:$0xff] %vm598, %v539
      %601 = vst.msk [vmem:[%s226 + $0x10] sm:$0xff] %vm598, %v544
      %602 = vst.msk [vmem:[%s226 + $0x18] sm:$0xff] %vm598, %v547
      %603 = vst.msk [vmem:[%s226 + $0x20] sm:$0xff] %vm598, %v552
      %604 = vst.msk [vmem:[%s226 + $0x28] sm:$0xff] %vm598, %v555
      %605 = vst.msk [vmem:[%s226 + $0x30] sm:$0xff] %vm598, %v560
      %606 = vst.msk [vmem:[%s226 + $0x38] sm:$0xff] %vm598, %v563
      %607 = vst.msk [vmem:[%s226 + $0x40] sm:$0xff] %vm598, %v568
      %608 = vst.msk [vmem:[%s226 + $0x48] sm:$0xff] %vm598, %v571
      %609 = vst.msk [vmem:[%s226 + $0x50] sm:$0xff] %vm598, %v576
      %610 = vst.msk [vmem:[%s226 + $0x58] sm:$0xff] %vm598, %v579
      %611 = vst.msk [vmem:[%s226 + $0x60] sm:$0xff] %vm598, %v584
      %612 = vst.msk [vmem:[%s226 + $0x68] sm:$0xff] %vm598, %v587
      %613 = vst.msk [vmem:[%s226 + $0x70] sm:$0xff] %vm598, %v592
      %614 = vst.msk [vmem:[%s226 + $0x78] sm:$0xff] %vm598, %v595
      %s615 = smul.u32 16, %s16
      %p616 = scmp.lt.s32.totalorder %s615, 31
      %s617 = scalar_select %p616, %s615, 31
      %s618 = smul.addr %s617, 8
      %s619 = scalar_lea.vmem %s5, %s618
      // Predicated region
      $region41: #{classifier_forward.1} parent=39 // pred_check
        %p620 = pneg %p144
      $region42: #{classifier_forward.1} parent=39 // pred_check_branch
        %622 = sbr.rel (%p620) target = $region44
      $region43: #{classifier_forward.1} parent=39 // pred_region
        %s623 = smul.u32 16, %s16
      $region44: #{classifier_forward.1} parent=39 // pred_fallthru
        _
    $region40: #{classifier_forward.1} parent=5 // pred_fallthru
      _
    %p624 = scmp.le.s32.totalorder 2, %s11
    // Predicated region
    $region45: #{classifier_forward.1} parent=5 // pred_check
      %p625 = pneg %p624
    $region46: #{classifier_forward.1} parent=5 // pred_check_branch
      %627 = sbr.rel (%p625) target = $region48
    $region47: #{classifier_forward.1} parent=5 // pred_region
      %s628 = ssub.s32 %s11, 2
      // Predicated region
      $region49: #{classifier_forward.1} parent=47 // pred_check
        %p629 = pneg %p150
      $region50: #{classifier_forward.1} parent=47 // pred_check_branch
        %631 = sbr.rel (%p629) target = $region52
      $region51: #{classifier_forward.1} parent=47 // pred_region
        %s632 = smul.u32 16, %s17
        %p633 = scmp.lt.s32.totalorder %s632, 31
        %s634 = scalar_select %p633, %s632, 31
        %s635 = smul.addr %s634, 8
        %s636 = scalar_lea.vmem %s5, %s635
      $region52: #{classifier_forward.1} parent=47 // pred_fallthru
        _
    $region48: #{classifier_forward.1} parent=5 // pred_fallthru
      _
  $region6: #{classifier_forward.1} parent=0 // loop_footer
    %s15 = sadd.s32 1, %s11
  $region7: #{classifier_forward.1} parent=0 // loop_footer_branch
    %10 = sbr.rel target = $region3
  $region8: #{classifier_forward.1} parent=0 // loop_exit
    _

</llo_original>
